<compile_context>
chip_gen: v5e
topology: v5e:2x2
jax: 0.10.0
libtpu: 0.0.40
codegen_flags: <defaults>
</compile_context>

<pallas_src>
import functools

import jax
import jax.numpy as jnp
from jax.experimental import pallas as pl
from jax.experimental.pallas import tpu as pltpu


def _pu_loss_kernel(adj_ref, pos_ref, unl_ref, yp_ref, out_ref,
                    reach_ref, nxt_ref,
                    *, tn, n_cols, pi_hat, pi_check, coef_l, do_hops):
    hop = pl.program_id(0)
    j = pl.program_id(1)
    last_hop = pl.num_programs(0) - 1
    last_col = n_cols - 1

    # Initialise the reach set (dist == 0) from the positive-node mask.
    @pl.when((hop == 0) & (j == 0))
    def _():
        reach_ref[...] = pos_ref[...].astype(jnp.bfloat16)

    if do_hops:
        # One column block of this hop (bf16 x bf16 -> f32 accumulate):
        #   nxt[j] = reach @ A[:, j*tn:(j+1)*tn]
        nxt_ref[j] = jnp.dot(reach_ref[...], adj_ref[...],
                             preferred_element_type=jnp.float32)

        # End of hop: fold newly reached nodes into the reach set.
        @pl.when(j == last_col)
        def _():
            nxt = nxt_ref[...]                       # (n_cols, 1, tn) f32
            for c in range(n_cols):                  # static, unrolled
                blk = reach_ref[:, c * tn:(c + 1) * tn]
                reach_ref[:, c * tn:(c + 1) * tn] = jnp.where(
                    nxt[c] > 0.0, jnp.ones_like(blk), blk)

    # Epilogue: masked |.| reductions and the final scalar, last step only.
    @pl.when((hop == last_hop) & (j == last_col))
    def _():
        reach = reach_ref[...].astype(jnp.float32)
        pos = pos_ref[...]
        unl = unl_ref[...]
        yp = yp_ref[...]

        near = unl * reach                           # unlabeled, dist <= delta
        far = unl * (1.0 - reach)                    # unlabeled, dist  > delta
        n_near = jnp.sum(near)
        n_far = jnp.sum(far)

        sum_l = jnp.sum(jnp.abs(yp - 1.0) * pos)
        loss_near = jnp.sum(jnp.abs(yp - pi_hat) * near) / jnp.maximum(n_near, 1.0)
        loss_far = jnp.sum(jnp.abs(yp - pi_check) * far) / jnp.maximum(n_far, 1.0)

        out_ref[0, 0] = coef_l * sum_l + loss_near + loss_far


def distance_aware_pu_loss(y_pred, y_true, pos_idx, unlabeled_idx, edge_index,
                           prior_positive=0.5, delta=2):
    """Mirrors DistanceAwarePULoss.forward (y_true is unused, as in the reference)."""
    del y_true
    n = int(y_pred.shape[0])
    n_l = int(pos_idx.shape[0])
    delta = int(delta)

    pi_hat = float(prior_positive) * 1.2
    pi_check = float(prior_positive) * 0.8
    # Hoisted static scalars: 2*(pi_hat+pi_check) * (1/n_L) baked at trace time.
    coef_l = 2.0 * (pi_hat + pi_check) / float(n_l)

    # Column-tile width (lane dim): multiple of 128, lane-dense; pad N to it.
    n_pad = max(128, ((n + 127) // 128) * 128)
    if n_pad >= 2048:
        tn = 512
    elif n_pad >= 512:
        tn = 256
    else:
        tn = 128
    n_pad = ((n_pad + tn - 1) // tn) * tn
    n_cols = n_pad // tn
    n_hops = max(delta, 1)
    do_hops = delta >= 1

    # Dense symmetric adjacency in bf16, built with a single scatter.
    # TODO(synk): cache this densified adjacency across calls (it depends only
    # on edge_index) instead of rebuilding n_pad^2 bytes of HBM every call.
    src = jnp.concatenate([edge_index[0], edge_index[1]]).astype(jnp.int32)
    dst = jnp.concatenate([edge_index[1], edge_index[0]]).astype(jnp.int32)
    adj = jnp.zeros((n_pad, n_pad), jnp.bfloat16).at[src, dst].set(1.0)

    pos_mask = jnp.zeros((1, n_pad), jnp.float32).at[0, pos_idx].set(1.0)
    unl_mask = jnp.zeros((1, n_pad), jnp.float32).at[0, unlabeled_idx].set(1.0)
    yp = jnp.zeros((1, n_pad), jnp.float32).at[0, :n].set(
        y_pred.astype(jnp.float32))

    kernel = functools.partial(
        _pu_loss_kernel, tn=tn, n_cols=n_cols, pi_hat=pi_hat,
        pi_check=pi_check, coef_l=coef_l, do_hops=do_hops)

    # VMEM budget: double-buffered bf16 adjacency tile + row vectors + slack,
    # capped well below v7x's 64 MiB physical VMEM (fine on v5e/v6e too).
    blk_bytes = n_pad * tn * 2                       # one bf16 adjacency tile
    vec_bytes = n_pad * 4                            # one f32 row vector
    vmem_limit = int(min(max(2 * blk_bytes + 12 * vec_bytes + (4 << 20),
                             16 << 20), 40 << 20))

    # TODO(synk): on v7x, shard the column blocks of each hop across the two
    # TensorCores (core_map + core_barrier per hop) for ~2x on the matmuls.
    grid_spec = pltpu.PrefetchScalarGridSpec(
        num_scalar_prefetch=0,
        grid=(n_hops, n_cols),
        in_specs=[
            # Adjacency streams one (n_pad, tn) column block per grid step.
            pl.BlockSpec((n_pad, tn), lambda h, j: (0, j)),
            # Small row vectors stay resident (block index never changes).
            pl.BlockSpec((1, n_pad), lambda h, j: (0, 0)),
            pl.BlockSpec((1, n_pad), lambda h, j: (0, 0)),
            pl.BlockSpec((1, n_pad), lambda h, j: (0, 0)),
        ],
        # Scalar loss goes to SMEM (avoids a padded (8,128) VMEM tile + DMA).
        out_specs=pl.BlockSpec(memory_space=pltpu.MemorySpace.SMEM),
        scratch_shapes=[
            pltpu.VMEM((1, n_pad), jnp.bfloat16),    # reach (persistent)
            pltpu.VMEM((n_cols, 1, tn), jnp.float32),  # this hop's frontier
        ],
    )

    out = pl.pallas_call(
        kernel,
        out_shape=jax.ShapeDtypeStruct((1, 1), jnp.float32),
        grid_spec=grid_spec,
        compiler_params=pltpu.CompilerParams(
            # Both axes carry state through VMEM scratch -> "arbitrary".
            dimension_semantics=("arbitrary", "arbitrary"),
            vmem_limit_bytes=vmem_limit),
    )(adj, pos_mask, unl_mask, yp)
    return out[0, 0]


def _reference_loss(y_pred, pos_idx, unlabeled_idx, edge_index,
                    prior_positive=0.5, delta=2):
    """Pure-NumPy reference (BFS from positive set, same formula)."""
    import numpy as np
    n = y_pred.shape[0]
    y_pred = np.asarray(y_pred, dtype=np.float64)
    adj = np.zeros((n, n), dtype=bool)
    ei = np.asarray(edge_index)
    adj[ei[0], ei[1]] = True
    adj[ei[1], ei[0]] = True
    dist = np.full(n, np.inf)
    dist[np.asarray(pos_idx)] = 0
    frontier = np.zeros(n, dtype=bool)
    frontier[np.asarray(pos_idx)] = True
    for k in range(1, n):
        nxt = adj[frontier].any(axis=0) & ~np.isfinite(dist)
        if not nxt.any():
            break
        dist[nxt] = k
        frontier = nxt
    unl = np.asarray(unlabeled_idx)
    near = unl[dist[unl] <= delta]
    far = unl[dist[unl] > delta]
    pi_hat = prior_positive * 1.2
    pi_check = prior_positive * 0.8
    loss_l = np.abs(y_pred[np.asarray(pos_idx)] - 1).sum() / len(pos_idx)
    loss_near = np.abs(y_pred[near] - pi_hat).sum() / max(len(near), 1)
    loss_far = np.abs(y_pred[far] - pi_check).sum() / max(len(far), 1)
    return 2 * (pi_hat + pi_check) * loss_l + loss_near + loss_far


if __name__ == "__main__":
    import numpy as np

    key = jax.random.PRNGKey(0)
    n_nodes = 384          # -> n_pad=384, tn=128, 3 column blocks (exercises grid)
    n_edges = 1024
    n_pos = 32

    k1, k2, k3 = jax.random.split(key, 3)
    y_pred = jax.random.uniform(k1, (n_nodes,), jnp.float32)
    src = jax.random.randint(k2, (n_edges,), 0, n_nodes, jnp.int32)
    dst = jax.random.randint(k3, (n_edges,), 0, n_nodes, jnp.int32)
    edge_index = jnp.stack([src, dst], axis=0)          # (2, E)

    pos_idx = jnp.arange(n_pos, dtype=jnp.int32)
    unlabeled_idx = jnp.arange(n_pos, n_nodes, dtype=jnp.int32)
    y_true = jnp.where(jnp.arange(n_nodes) < n_pos, 1, -1).astype(jnp.int32)

    loss = distance_aware_pu_loss(y_pred, y_true, pos_idx, unlabeled_idx,
                                  edge_index, prior_positive=0.5, delta=2)
    loss = jax.block_until_ready(loss)

    ref = _reference_loss(np.asarray(y_pred), np.asarray(pos_idx),
                          np.asarray(unlabeled_idx), np.asarray(edge_index),
                          prior_positive=0.5, delta=2)
    assert abs(float(loss) - float(ref)) <= 1e-3 * max(1.0, abs(float(ref))), \
        (float(loss), float(ref))

    print("KERNEL_OK")
</pallas_src>

<mosaic_0001>
module attributes {stable_mosaic.version = 11 : i64} {
  func.func @_pu_loss_kernel(%arg0: i32, %arg1: i32, %arg2: memref<384x128xbf16, #tpu.memory_space<vmem>>, %arg3: memref<1x384xf32, #tpu.memory_space<vmem>>, %arg4: memref<1x384xf32, #tpu.memory_space<vmem>>, %arg5: memref<1x384xf32, #tpu.memory_space<vmem>>, %arg6: memref<1x1xf32, #tpu.memory_space<smem>>, %arg7: memref<1x384xbf16, #tpu.memory_space<vmem>>, %arg8: memref<3x1x128xf32, #tpu.memory_space<vmem>>) attributes {dimension_semantics = [#tpu.dimension_semantics<arbitrary>, #tpu.dimension_semantics<arbitrary>], iteration_bounds = array<i64: 2, 3>, scalar_prefetch = 0 : i64, scratch_operands = 2 : i64, tpu.core_type = #tpu.core_type<tc>, window_params = [{transform_indices = @transform_0, window_bounds = array<i64: 384, 128>}, {pipeline_mode = #tpu.pipeline_mode<synchronous>, transform_indices = @transform_1, window_bounds = array<i64: 1, 384>}, {pipeline_mode = #tpu.pipeline_mode<synchronous>, transform_indices = @transform_2, window_bounds = array<i64: 1, 384>}, {pipeline_mode = #tpu.pipeline_mode<synchronous>, transform_indices = @transform_3, window_bounds = array<i64: 1, 384>}, {transform_indices = @transform_4, window_bounds = array<i64: 1, 1>}]} {
    %c0_i32 = arith.constant 0 : i32
    %0 = arith.cmpi eq, %arg0, %c0_i32 : i32
    %c0_i32_0 = arith.constant 0 : i32
    %1 = arith.cmpi eq, %arg1, %c0_i32_0 : i32
    %2 = arith.andi %0, %1 : i1
    %3 = arith.extui %2 : i1 to i32
    %c0_i32_1 = arith.constant 0 : i32
    %4 = arith.cmpi ne, %3, %c0_i32_1 : i32
    scf.if %4 {
      %c0_10 = arith.constant 0 : index
      %c0_11 = arith.constant 0 : index
      %20 = vector.load %arg3[%c0_10, %c0_11] : memref<1x384xf32, #tpu.memory_space<vmem>>, vector<1x384xf32>
      %21 = arith.truncf %20 : vector<1x384xf32> to vector<1x384xbf16>
      %c0_12 = arith.constant 0 : index
      %c0_13 = arith.constant 0 : index
      %22 = vector.load %arg7[%c0_12, %c0_13] : memref<1x384xbf16, #tpu.memory_space<vmem>>, vector<1x384xbf16>
      tpu.vector_store %arg7[%c0_12, %c0_13], %21 {strides = array<i32>} : memref<1x384xbf16, #tpu.memory_space<vmem>>, vector<1x384xbf16>,
    } else {
    }
    %c0 = arith.constant 0 : index
    %c0_2 = arith.constant 0 : index
    %5 = vector.load %arg7[%c0, %c0_2] : memref<1x384xbf16, #tpu.memory_space<vmem>>, vector<1x384xbf16>
    %c0_3 = arith.constant 0 : index
    %c0_4 = arith.constant 0 : index
    %6 = vector.load %arg2[%c0_3, %c0_4] : memref<384x128xbf16, #tpu.memory_space<vmem>>, vector<384x128xbf16>
    %cst = arith.constant dense<0.000000e+00> : vector<1x128xf32>
    %7 = tpu.matmul %5, %6, %cst {dimension_numbers = #tpu.dot_dimension_numbers<[1], [0], [0], [1], [0, 0, 1, 1], [], []>} : vector<1x384xbf16>, vector<384x128xbf16>, vector<1x128xf32> -> vector<1x128xf32>
    %8 = arith.index_cast %arg1 : i32 to index
    %c0_5 = arith.constant 0 : index
    %c0_6 = arith.constant 0 : index
    %9 = vector.load %arg8[%8, %c0_5, %c0_6] : memref<3x1x128xf32, #tpu.memory_space<vmem>>, vector<1x1x128xf32>
    %10 = vector.shape_cast %9 : vector<1x1x128xf32> to vector<1x128xf32>
    %11 = vector.shape_cast %7 : vector<1x128xf32> to vector<1x1x128xf32>
    tpu.vector_store %arg8[%8, %c0_5, %c0_6], %11 {strides = array<i32>} : memref<3x1x128xf32, #tpu.memory_space<vmem>>, vector<1x1x128xf32>,
    %c2_i32 = arith.constant 2 : i32
    %12 = arith.cmpi eq, %arg1, %c2_i32 : i32
    %13 = arith.extui %12 : i1 to i32
    %c0_i32_7 = arith.constant 0 : i32
    %14 = arith.cmpi ne, %13, %c0_i32_7 : i32
    scf.if %14 {
      %c0_10 = arith.constant 0 : index
      %c0_11 = arith.constant 0 : index
      %c0_12 = arith.constant 0 : index
      %20 = vector.load %arg8[%c0_10, %c0_11, %c0_12] : memref<3x1x128xf32, #tpu.memory_space<vmem>>, vector<3x1x128xf32>
      %c0_13 = arith.constant 0 : index
      %c0_14 = arith.constant 0 : index
      %21 = vector.load %arg7[%c0_13, %c0_14] : memref<1x384xbf16, #tpu.memory_space<vmem>>, vector<1x128xbf16>
      %22 = vector.extract_strided_slice %20 {offsets = [0, 0, 0], sizes = [1, 1, 128], strides = [1, 1, 1]} : vector<3x1x128xf32> to vector<1x1x128xf32>
      %23 = vector.shape_cast %22 : vector<1x1x128xf32> to vector<1x128xf32>
      %cst_15 = arith.constant 0.000000e+00 : f32
      %24 = vector.broadcast %cst_15 : f32 to vector<1x128xf32>
      %25 = arith.cmpf ogt, %23, %24 : vector<1x128xf32>
      %cst_16 = arith.constant 1.000000e+00 : bf16
      %26 = vector.broadcast %cst_16 : bf16 to vector<1x128xbf16>
      %27 = arith.select %25, %26, %21 : vector<1x128xi1>, vector<1x128xbf16>
      %c0_17 = arith.constant 0 : index
      %c0_18 = arith.constant 0 : index
      %28 = vector.load %arg7[%c0_17, %c0_18] : memref<1x384xbf16, #tpu.memory_space<vmem>>, vector<1x128xbf16>
      tpu.vector_store %arg7[%c0_17, %c0_18], %27 {strides = array<i32>} : memref<1x384xbf16, #tpu.memory_space<vmem>>, vector<1x128xbf16>,
      %c0_19 = arith.constant 0 : index
      %c128 = arith.constant 128 : index
      %29 = vector.load %arg7[%c0_19, %c128] : memref<1x384xbf16, #tpu.memory_space<vmem>>, vector<1x128xbf16>
      %30 = vector.extract_strided_slice %20 {offsets = [1, 0, 0], sizes = [1, 1, 128], strides = [1, 1, 1]} : vector<3x1x128xf32> to vector<1x1x128xf32>
      %31 = vector.shape_cast %30 : vector<1x1x128xf32> to vector<1x128xf32>
      %cst_20 = arith.constant 0.000000e+00 : f32
      %32 = vector.broadcast %cst_20 : f32 to vector<1x128xf32>
      %33 = arith.cmpf ogt, %31, %32 : vector<1x128xf32>
      %cst_21 = arith.constant 1.000000e+00 : bf16
      %34 = vector.broadcast %cst_21 : bf16 to vector<1x128xbf16>
      %35 = arith.select %33, %34, %29 : vector<1x128xi1>, vector<1x128xbf16>
      %c0_22 = arith.constant 0 : index
      %c128_23 = arith.constant 128 : index
      %36 = vector.load %arg7[%c0_22, %c128_23] : memref<1x384xbf16, #tpu.memory_space<vmem>>, vector<1x128xbf16>
      tpu.vector_store %arg7[%c0_22, %c128_23], %35 {strides = array<i32>} : memref<1x384xbf16, #tpu.memory_space<vmem>>, vector<1x128xbf16>,
      %c0_24 = arith.constant 0 : index
      %c256 = arith.constant 256 : index
      %37 = vector.load %arg7[%c0_24, %c256] : memref<1x384xbf16, #tpu.memory_space<vmem>>, vector<1x128xbf16>
      %38 = vector.extract_strided_slice %20 {offsets = [2, 0, 0], sizes = [1, 1, 128], strides = [1, 1, 1]} : vector<3x1x128xf32> to vector<1x1x128xf32>
      %39 = vector.shape_cast %38 : vector<1x1x128xf32> to vector<1x128xf32>
      %cst_25 = arith.constant 0.000000e+00 : f32
      %40 = vector.broadcast %cst_25 : f32 to vector<1x128xf32>
      %41 = arith.cmpf ogt, %39, %40 : vector<1x128xf32>
      %cst_26 = arith.constant 1.000000e+00 : bf16
      %42 = vector.broadcast %cst_26 : bf16 to vector<1x128xbf16>
      %43 = arith.select %41, %42, %37 : vector<1x128xi1>, vector<1x128xbf16>
      %c0_27 = arith.constant 0 : index
      %c256_28 = arith.constant 256 : index
      %44 = vector.load %arg7[%c0_27, %c256_28] : memref<1x384xbf16, #tpu.memory_space<vmem>>, vector<1x128xbf16>
      tpu.vector_store %arg7[%c0_27, %c256_28], %43 {strides = array<i32>} : memref<1x384xbf16, #tpu.memory_space<vmem>>, vector<1x128xbf16>,
    } else {
    }
    %c1_i32 = arith.constant 1 : i32
    %15 = arith.cmpi eq, %arg0, %c1_i32 : i32
    %c2_i32_8 = arith.constant 2 : i32
    %16 = arith.cmpi eq, %arg1, %c2_i32_8 : i32
    %17 = arith.andi %15, %16 : i1
    %18 = arith.extui %17 : i1 to i32
    %c0_i32_9 = arith.constant 0 : i32
    %19 = arith.cmpi ne, %18, %c0_i32_9 : i32
    scf.if %19 {
      %c0_10 = arith.constant 0 : index
      %c0_11 = arith.constant 0 : index
      %20 = vector.load %arg7[%c0_10, %c0_11] : memref<1x384xbf16, #tpu.memory_space<vmem>>, vector<1x384xbf16>
      %21 = arith.extf %20 : vector<1x384xbf16> to vector<1x384xf32>
      %c0_12 = arith.constant 0 : index
      %c0_13 = arith.constant 0 : index
      %22 = vector.load %arg3[%c0_12, %c0_13] : memref<1x384xf32, #tpu.memory_space<vmem>>, vector<1x384xf32>
      %c0_14 = arith.constant 0 : index
      %c0_15 = arith.constant 0 : index
      %23 = vector.load %arg4[%c0_14, %c0_15] : memref<1x384xf32, #tpu.memory_space<vmem>>, vector<1x384xf32>
      %c0_16 = arith.constant 0 : index
      %c0_17 = arith.constant 0 : index
      %24 = vector.load %arg5[%c0_16, %c0_17] : memref<1x384xf32, #tpu.memory_space<vmem>>, vector<1x384xf32>
      %25 = arith.mulf %23, %21 : vector<1x384xf32>
      %cst_18 = arith.constant 1.000000e+00 : f32
      %26 = vector.broadcast %cst_18 : f32 to vector<1x384xf32>
      %27 = arith.subf %26, %21 : vector<1x384xf32>
      %28 = arith.mulf %23, %27 : vector<1x384xf32>
      %29 = vector.shape_cast %25 : vector<1x384xf32> to vector<1x1x384xf32>
      %cst_19 = arith.constant dense<0.000000e+00> : vector<1xf32>
      %30 = vector.multi_reduction <add>, %29, %cst_19 [1, 2] : vector<1x1x384xf32> to vector<1xf32>
      %31 = vector.shape_cast %30 : vector<1xf32> to vector<1x1x1xf32>
      %32 = vector.extract %31[0, 0, 0] : f32 from vector<1x1x1xf32>
      %33 = vector.shape_cast %28 : vector<1x384xf32> to vector<1x1x384xf32>
      %cst_20 = arith.constant dense<0.000000e+00> : vector<1xf32>
      %34 = vector.multi_reduction <add>, %33, %cst_20 [1, 2] : vector<1x1x384xf32> to vector<1xf32>
      %35 = vector.shape_cast %34 : vector<1xf32> to vector<1x1x1xf32>
      %36 = vector.extract %35[0, 0, 0] : f32 from vector<1x1x1xf32>
      %cst_21 = arith.constant 1.000000e+00 : f32
      %37 = vector.broadcast %cst_21 : f32 to vector<1x384xf32>
      %38 = arith.subf %24, %37 : vector<1x384xf32>
      %39 = math.absf %38 : vector<1x384xf32>
      %40 = arith.mulf %39, %22 : vector<1x384xf32>
      %41 = vector.shape_cast %40 : vector<1x384xf32> to vector<1x1x384xf32>
      %cst_22 = arith.constant dense<0.000000e+00> : vector<1xf32>
      %42 = vector.multi_reduction <add>, %41, %cst_22 [1, 2] : vector<1x1x384xf32> to vector<1xf32>
      %43 = vector.shape_cast %42 : vector<1xf32> to vector<1x1x1xf32>
      %44 = vector.extract %43[0, 0, 0] : f32 from vector<1x1x1xf32>
      %cst_23 = arith.constant 6.000000e-01 : f32
      %45 = vector.broadcast %cst_23 : f32 to vector<1x384xf32>
      %46 = arith.subf %24, %45 : vector<1x384xf32>
      %47 = math.absf %46 : vector<1x384xf32>
      %48 = arith.mulf %47, %25 : vector<1x384xf32>
      %49 = vector.shape_cast %48 : vector<1x384xf32> to vector<1x1x384xf32>
      %cst_24 = arith.constant dense<0.000000e+00> : vector<1xf32>
      %50 = vector.multi_reduction <add>, %49, %cst_24 [1, 2] : vector<1x1x384xf32> to vector<1xf32>
      %51 = vector.shape_cast %50 : vector<1xf32> to vector<1x1x1xf32>
      %52 = vector.extract %51[0, 0, 0] : f32 from vector<1x1x1xf32>
      %cst_25 = arith.constant 1.000000e+00 : f32
      %53 = arith.maximumf %32, %cst_25 : f32
      %54 = arith.divf %52, %53 : f32
      %cst_26 = arith.constant 4.000000e-01 : f32
      %55 = vector.broadcast %cst_26 : f32 to vector<1x384xf32>
      %56 = arith.subf %24, %55 : vector<1x384xf32>
      %57 = math.absf %56 : vector<1x384xf32>
      %58 = arith.mulf %57, %28 : vector<1x384xf32>
      %59 = vector.shape_cast %58 : vector<1x384xf32> to vector<1x1x384xf32>
      %cst_27 = arith.constant dense<0.000000e+00> : vector<1xf32>
      %60 = vector.multi_reduction <add>, %59, %cst_27 [1, 2] : vector<1x1x384xf32> to vector<1xf32>
      %61 = vector.shape_cast %60 : vector<1xf32> to vector<1x1x1xf32>
      %62 = vector.extract %61[0, 0, 0] : f32 from vector<1x1x1xf32>
      %cst_28 = arith.constant 1.000000e+00 : f32
      %63 = arith.maximumf %36, %cst_28 : f32
      %64 = arith.divf %62, %63 : f32
      %cst_29 = arith.constant 6.250000e-02 : f32
      %65 = arith.mulf %cst_29, %44 : f32
      %66 = arith.addf %65, %54 : f32
      %67 = arith.addf %66, %64 : f32
      %c0_30 = arith.constant 0 : index
      %c0_31 = arith.constant 0 : index
      %68 = memref.load %arg6[%c0_30, %c0_31] : memref<1x1xf32, #tpu.memory_space<smem>>
      memref.store %67, %arg6[%c0_30, %c0_31] : memref<1x1xf32, #tpu.memory_space<smem>>
    } else {
    }
    return
  }
  func.func @transform_0(%arg0: i32, %arg1: i32) -> (i32, i32) {
    %c0_i32 = arith.constant 0 : i32
    %c0_i32_0 = arith.constant 0 : i32
    return %c0_i32, %arg1 : i32, i32
  }
  func.func @transform_1(%arg0: i32, %arg1: i32) -> (i32, i32) {
    %c0_i32 = arith.constant 0 : i32
    %c0_i32_0 = arith.constant 0 : i32
    %c0_i32_1 = arith.constant 0 : i32
    return %c0_i32, %c0_i32_0 : i32, i32
  }
  func.func @transform_2(%arg0: i32, %arg1: i32) -> (i32, i32) {
    %c0_i32 = arith.constant 0 : i32
    %c0_i32_0 = arith.constant 0 : i32
    %c0_i32_1 = arith.constant 0 : i32
    return %c0_i32, %c0_i32_0 : i32, i32
  }
  func.func @transform_3(%arg0: i32, %arg1: i32) -> (i32, i32) {
    %c0_i32 = arith.constant 0 : i32
    %c0_i32_0 = arith.constant 0 : i32
    %c0_i32_1 = arith.constant 0 : i32
    return %c0_i32, %c0_i32_0 : i32, i32
  }
  func.func @transform_4(%arg0: i32, %arg1: i32) -> (i32, i32) {
    %c0_i32 = arith.constant 0 : i32
    %c0_i32_0 = arith.constant 0 : i32
    %c0_i32_1 = arith.constant 0 : i32
    return %c0_i32, %c0_i32_0 : i32, i32
  }
}

</mosaic_0001>

<llo_original>
// kernel: tpu_custom_call.1
$region0: #{tpu_custom_call.1}
  #allocation0 [shape = 'u32[]', space=smem, size = 0x4, offset = 0x4, fixed_abs, tag = 'smem constant byte address 0x4 - core index']
  #allocation1 [shape = 'u32[72,128]{1,0:T(1,128)}', space=vmem, size = 0x9000, scoped, tag = 'internal scratch']
  #allocation2 [shape = 'bf16[1,384]{1,0:T(2,128)(2,1)}', space=vmem, size = 0x600, scoped, tag = 'scratch operand']
  #allocation3 [shape = 'f32[3,1,128]{2,1,0:T(1,128)}', space=vmem, size = 0x600, scoped, tag = 'scratch operand']
  %s0 = inlined_call_operand.hbm [shape: bf16[384,384], index: 0, kind: input, shape index: {}]
  %s1 = inlined_call_operand.hbm [shape: f32[1,384], index: 1, kind: input, shape index: {}]
  %s2 = inlined_call_operand.hbm [shape: f32[1,384], index: 2, kind: input, shape index: {}]
  %s3 = inlined_call_operand.hbm [shape: f32[1,384], index: 3, kind: input, shape index: {}]
  %s4 = inlined_call_operand.hbm [shape: f32[1,1], index: 4, kind: output, shape index: {}]
  %s5 = sld [smem:[#allocation0]]
  $region77: #{tpu_custom_call.1} parent=0
    _
  %s7 = ssub.s32 1, %s5
  %s8 = scalar_select 0, %s7, %s5
  $region1: #{tpu_custom_call.1} parent=0
    #allocation4 [shape = 'u8[196608]{0}', space=vmem, size = 0x30000, scoped, tag = 'input window, operand 0']
    #allocation5 [shape = 's32[2]{0}', space=sflag, size = 0x8, scoped, tag = 'scoped memory for tpu_custom_call.1']
    #allocation6 [shape = 's32[2]{0}', space=sflag, size = 0x8, scoped, tag = 'scoped memory for tpu_custom_call.1']
    #allocation7 [shape = 'u8[1536]{0}', space=vmem, size = 0x800, scoped, tag = 'input window, operand 1, single buffered']
    #allocation8 [shape = 's32[1]{0}', space=sflag, size = 0x4, scoped, tag = 'scoped memory for tpu_custom_call.1']
    #allocation9 [shape = 'u8[1536]{0}', space=vmem, size = 0x800, scoped, tag = 'input window, operand 2, single buffered']
    #allocation10 [shape = 'u8[1536]{0}', space=vmem, size = 0x800, scoped, tag = 'input window, operand 3, single buffered']
    #allocation11 [shape = 's32[1]{0}', space=sflag, size = 0x4, scoped, tag = 'scoped memory for tpu_custom_call.1']
    #allocation12 [shape = 'u8[512]{0}', space=smem, size = 0x200, scoped, tag = 'output window, operand 0, single buffered']
    %9 = vsyncpa [#allocation5], 0
    %s10 = scalar_lea.sflag [#allocation5], 1
    %11 = vsyncpa %s10, 0
    %12 = vsyncpa [#allocation8], 0
    %13 = vsyncpa [#allocation11], 0
    %14 = vsyncpa [#allocation6], 0
    loop: start=0, step=1, limit=8
    $region2: #{tpu_custom_call.1} parent=1 // loop_pre_header
      _
    $region3: #{tpu_custom_call.1} parent=1 // loop_header
      %s16 = sphi 0, %s20
      %p17 = scmp.ge.s32.totalorder %s16, 8
      %s23 = sphi 0, %s35
      %s24 = sphi 0, %s31
      %s25 = sphi 0, %s23
      %s26 = sphi 0, %s24
      %s27 = sphi 0, %s25
      %s28 = sphi 0, %s26
      %s38 = sphi 0, %s40
      %s41 = sphi 0, %s38
      %s42 = sphi 0, %s41
      %s58 = sphi 0, %s42
      %s62 = sphi 0, %s62
      %s64 = sphi 0, %s62
      %s65 = sphi 0, %s64
      %s79 = sphi 0, %s65
      %s83 = sphi 0, %s83
      %s85 = sphi 0, %s83
      %s86 = sphi 0, %s85
      %s100 = sphi 0, %s86
      %s104 = sphi 0, %s104
      %s106 = sphi 0, %s104
      %s107 = sphi 0, %s106
      %s121 = sphi 0, %s107
      %s125 = sphi 0, %s125
      %s127 = sphi 0, %s125
      %s128 = sphi 0, %s127
      %s142 = sphi 0, %s128
    $region4: #{tpu_custom_call.1} parent=1 // loop_header_branch
      %19 = sbr.rel (%p17) target = $region8
    $region5: #{tpu_custom_call.1} parent=1 // loop_body
      %s21 = ssub.s32 %s16, 1
      %s22 = ssub.s32 %s16, 2
      %s29 = sadd.s32 1, %s24
      %p30 = scmp.ge.s32.totalorder %s29, 3
      %s31 = scalar_select %p30, 0, %s29
      %s32 = sadd.s32 1, %s23
      %s33 = scalar_select %p30, %s32, %s23
      %p34 = scmp.ge.s32.totalorder %s33, 2
      %s35 = scalar_select %p34, 0, %s33
      %s36 = ssub.s32 %s24, %s31
      %p37 = scmp.eq.s32.totalorder %s36, 0
      %s39 = sadd.s32 %s38, 1
      %s40 = scalar_select %p37, %s38, %s39
      %p43 = pneg %p37
      %p44 = scmp.eq.s32.totalorder %s16, 5
      %p45 = por %p43, %p44
      %p46 = scmp.ne.s32.totalorder %s38, %s41
      %p47 = scmp.eq.s32.totalorder %s16, 0
      %p48 = por %p46, %p47
      %p49 = scmp.ne.s32.totalorder %s38, %s41
      %p50 = scmp.eq.s32.totalorder %s21, 5
      %p51 = por %p49, %p50
      %p52 = scmp.ne.s32.totalorder %s41, %s42
      %p53 = scmp.eq.s32.totalorder %s21, 0
      %p54 = por %p52, %p53
      %p55 = scmp.ne.s32.totalorder %s41, %s42
      %p56 = scmp.eq.s32.totalorder %s22, 5
      %p57 = por %p55, %p56
      %p59 = scmp.ne.s32.totalorder %s42, %s58
      %p60 = scmp.eq.s32.totalorder %s22, 0
      %p61 = por %p59, %p60
      %s63 = sadd.s32 %s62, 1
      %p66 = scmp.eq.s32.totalorder %s16, 5
      %p67 = scmp.ne.s32.totalorder %s62, %s64
      %p68 = scmp.eq.s32.totalorder %s16, 0
      %p69 = por %p67, %p68
      %p70 = scmp.ne.s32.totalorder %s62, %s64
      %p71 = scmp.eq.s32.totalorder %s21, 5
      %p72 = por %p70, %p71
      %p73 = scmp.ne.s32.totalorder %s64, %s65
      %p74 = scmp.eq.s32.totalorder %s21, 0
      %p75 = por %p73, %p74
      %p76 = scmp.ne.s32.totalorder %s64, %s65
      %p77 = scmp.eq.s32.totalorder %s22, 5
      %p78 = por %p76, %p77
      %p80 = scmp.ne.s32.totalorder %s65, %s79
      %p81 = scmp.eq.s32.totalorder %s22, 0
      %p82 = por %p80, %p81
      %s84 = sadd.s32 %s83, 1
      %p87 = scmp.eq.s32.totalorder %s16, 5
      %p88 = scmp.ne.s32.totalorder %s83, %s85
      %p89 = scmp.eq.s32.totalorder %s16, 0
      %p90 = por %p88, %p89
      %p91 = scmp.ne.s32.totalorder %s83, %s85
      %p92 = scmp.eq.s32.totalorder %s21, 5
      %p93 = por %p91, %p92
      %p94 = scmp.ne.s32.totalorder %s85, %s86
      %p95 = scmp.eq.s32.totalorder %s21, 0
      %p96 = por %p94, %p95
      %p97 = scmp.ne.s32.totalorder %s85, %s86
      %p98 = scmp.eq.s32.totalorder %s22, 5
      %p99 = por %p97, %p98
      %p101 = scmp.ne.s32.totalorder %s86, %s100
      %p102 = scmp.eq.s32.totalorder %s22, 0
      %p103 = por %p101, %p102
      %s105 = sadd.s32 %s104, 1
      %p108 = scmp.eq.s32.totalorder %s16, 5
      %p109 = scmp.ne.s32.totalorder %s104, %s106
      %p110 = scmp.eq.s32.totalorder %s16, 0
      %p111 = por %p109, %p110
      %p112 = scmp.ne.s32.totalorder %s104, %s106
      %p113 = scmp.eq.s32.totalorder %s21, 5
      %p114 = por %p112, %p113
      %p115 = scmp.ne.s32.totalorder %s106, %s107
      %p116 = scmp.eq.s32.totalorder %s21, 0
      %p117 = por %p115, %p116
      %p118 = scmp.ne.s32.totalorder %s106, %s107
      %p119 = scmp.eq.s32.totalorder %s22, 5
      %p120 = por %p118, %p119
      %p122 = scmp.ne.s32.totalorder %s107, %s121
      %p123 = scmp.eq.s32.totalorder %s22, 0
      %p124 = por %p122, %p123
      %s126 = sadd.s32 %s125, 1
      %p129 = scmp.eq.s32.totalorder %s16, 5
      %p130 = scmp.ne.s32.totalorder %s125, %s127
      %p131 = scmp.eq.s32.totalorder %s16, 0
      %p132 = por %p130, %p131
      %p133 = scmp.ne.s32.totalorder %s125, %s127
      %p134 = scmp.eq.s32.totalorder %s21, 5
      %p135 = por %p133, %p134
      %p136 = scmp.ne.s32.totalorder %s127, %s128
      %p137 = scmp.eq.s32.totalorder %s21, 0
      %p138 = por %p136, %p137
      %p139 = scmp.ne.s32.totalorder %s127, %s128
      %p140 = scmp.eq.s32.totalorder %s22, 5
      %p141 = por %p139, %p140
      %p143 = scmp.ne.s32.totalorder %s128, %s142
      %p144 = scmp.eq.s32.totalorder %s22, 0
      %p145 = por %p143, %p144
      %p146 = scmp.le.s32.totalorder 1, %s16
      %p147 = scmp.lt.s32.totalorder %s16, 7
      %p148 = pnand %p146, %p147
      %p149 = pneg %p148
      // Predicated region
      $region9: #{tpu_custom_call.1} parent=5 // pred_check
        _
      $region10: #{tpu_custom_call.1} parent=5 // pred_check_branch
        %151 = sbr.rel (%p148) target = $region12
      $region11: #{tpu_custom_call.1} parent=5 // pred_region
        %s152 = ssub.s32 %s16, 1
        // Predicated region
        $region13: #{tpu_custom_call.1} parent=11 // pred_check
          %p153 = pneg %p75
        $region14: #{tpu_custom_call.1} parent=11 // pred_check_branch
          %155 = sbr.rel (%p153) target = $region16
        $region15: #{tpu_custom_call.1} parent=11 // pred_region
          %157 = vsyncadd [#allocation8], 0
          %s159 = sshll.u32 %s1, 4
          %s160 = int_to_ptr.hbm [resolvable:$true] %s159
          %s161 = sshll.u32 [#allocation7], 4
          %s162 = int_to_ptr.vmem [resolvable:$true] %s161
          %164 = dma.hbm_to_vmem [thread:$0]  %s160, 48, %s162, [#allocation8]
        $region16: #{tpu_custom_call.1} parent=11 // pred_fallthru
          _
        // Predicated region
        $region17: #{tpu_custom_call.1} parent=11 // pred_check
          %p165 = pneg %p96
        $region18: #{tpu_custom_call.1} parent=11 // pred_check_branch
          %167 = sbr.rel (%p165) target = $region20
        $region19: #{tpu_custom_call.1} parent=11 // pred_region
          %169 = vsyncadd [#allocation8], 0
          %s171 = sshll.u32 %s2, 4
          %s172 = int_to_ptr.hbm [resolvable:$true] %s171
          %s173 = sshll.u32 [#allocation9], 4
          %s174 = int_to_ptr.vmem [resolvable:$true] %s173
          %176 = dma.hbm_to_vmem [thread:$0]  %s172, 48, %s174, [#allocation8]
        $region20: #{tpu_custom_call.1} parent=11 // pred_fallthru
          _
        // Predicated region
        $region21: #{tpu_custom_call.1} parent=11 // pred_check
          %p177 = pneg %p117
        $region22: #{tpu_custom_call.1} parent=11 // pred_check_branch
          %179 = sbr.rel (%p177) target = $region24
        $region23: #{tpu_custom_call.1} parent=11 // pred_region
          %181 = vsyncadd [#allocation11], 0
          %s183 = sshll.u32 %s3, 4
          %s184 = int_to_ptr.hbm [resolvable:$true] %s183
          %s185 = sshll.u32 [#allocation10], 4
          %s186 = int_to_ptr.vmem [resolvable:$true] %s185
          %188 = dma.hbm_to_vmem [thread:$0]  %s184, 48, %s186, [#allocation11]
        $region24: #{tpu_custom_call.1} parent=11 // pred_fallthru
          _
      $region12: #{tpu_custom_call.1} parent=5 // pred_fallthru
        _
      %p189 = scmp.lt.s32.totalorder %s16, 6
      // Predicated region
      $region25: #{tpu_custom_call.1} parent=5 // pred_check
        %p190 = pneg %p189
      $region26: #{tpu_custom_call.1} parent=5 // pred_check_branch
        %192 = sbr.rel (%p190) target = $region28
      $region27: #{tpu_custom_call.1} parent=5 // pred_region
        // Predicated region
        $region29: #{tpu_custom_call.1} parent=27 // pred_check
          %p193 = pneg %p48
        $region30: #{tpu_custom_call.1} parent=27 // pred_check_branch
          %195 = sbr.rel (%p193) target = $region32
        $region31: #{tpu_custom_call.1} parent=27 // pred_region
          %s196 = sand.u32 %s38, 1
          %s197 = scalar_lea.sflag [#allocation5], %s196
          %s198 = sand.u32 %s38, 1
          %s199 = smul.addr %s198, 192
          %s200 = scalar_lea.vmem [#allocation4], %s199
          %202 = vsyncadd %s197, 0
          %s203 = smul.addr %s24, 4
          %s204 = scalar_lea.hbm %s0, %s203
          %s205 = sshll.u32 %s204, 4
          %s206 = int_to_ptr.hbm [resolvable:$true] %s205
          %s207 = sshll.u32 %s200, 4
          %s208 = int_to_ptr.vmem [resolvable:$true] %s207
          %213 = dma.hbm_to_vmem [thread:$0]  %s206, 3072, %s208, %s197, 192, 64, 4
        $region32: #{tpu_custom_call.1} parent=27 // pred_fallthru
          _
      $region28: #{tpu_custom_call.1} parent=5 // pred_fallthru
        _
      %p214 = scmp.le.s32.totalorder 1, %s16
      %p215 = scmp.lt.s32.totalorder %s16, 7
      %p216 = pnand %p214, %p215
      %p217 = pneg %p216
      // Predicated region
      $region33: #{tpu_custom_call.1} parent=5 // pred_check
        _
      $region34: #{tpu_custom_call.1} parent=5 // pred_check_branch
        %219 = sbr.rel (%p216) target = $region36
      $region35: #{tpu_custom_call.1} parent=5 // pred_region
        %s220 = ssub.s32 %s16, 1
        %s221 = sand.u32 %s41, 1
        %s222 = scalar_lea.sflag [#allocation5], %s221
        %s223 = sand.u32 %s41, 1
        %s224 = smul.addr %s223, 192
        %s225 = scalar_lea.vmem [#allocation4], %s224
        // Predicated region
        $region37: #{tpu_custom_call.1} parent=35 // pred_check
          %p226 = pneg %p54
        $region38: #{tpu_custom_call.1} parent=35 // pred_check_branch
          %228 = sbr.rel (%p226) target = $region40
        $region39: #{tpu_custom_call.1} parent=35 // pred_region
          %230 = dma.done %s222, 3072
        $region40: #{tpu_custom_call.1} parent=35 // pred_fallthru
          _
        // Predicated region
        $region41: #{tpu_custom_call.1} parent=35 // pred_check
          %p231 = pneg %p75
        $region42: #{tpu_custom_call.1} parent=35 // pred_check_branch
          %233 = sbr.rel (%p231) target = $region44
        $region43: #{tpu_custom_call.1} parent=35 // pred_region
          %235 = dma.done [#allocation8], 48
        $region44: #{tpu_custom_call.1} parent=35 // pred_fallthru
          _
        // Predicated region
        $region45: #{tpu_custom_call.1} parent=35 // pred_check
          %p236 = pneg %p96
        $region46: #{tpu_custom_call.1} parent=35 // pred_check_branch
          %238 = sbr.rel (%p236) target = $region48
        $region47: #{tpu_custom_call.1} parent=35 // pred_region
          %240 = dma.done [#allocation8], 48
        $region48: #{tpu_custom_call.1} parent=35 // pred_fallthru
          _
        // Predicated region
        $region49: #{tpu_custom_call.1} parent=35 // pred_check
          %p241 = pneg %p117
        $region50: #{tpu_custom_call.1} parent=35 // pred_check_branch
          %243 = sbr.rel (%p241) target = $region52
        $region51: #{tpu_custom_call.1} parent=35 // pred_region
          %245 = dma.done [#allocation11], 48
        $region52: #{tpu_custom_call.1} parent=35 // pred_fallthru
          _
        %s246 = sand.u32 %s41, 1
        %s247 = scalar_lea.sflag [#allocation5], %s246
        %s248 = sand.u32 %s41, 1
        %s249 = smul.addr %s248, 192
        %s250 = scalar_lea.vmem [#allocation4], %s249
        %p251 = pneg %p54
        %p252 = pneg %p51
        %p253 = pneg %p75
        %p254 = pneg %p72
        %p255 = pneg %p96
        %p256 = pneg %p93
        %p257 = pneg %p117
        %p258 = pneg %p114
        %p259 = pneg %p138
        %p260 = pneg %p135
        %p263 = scmp.eq.s32.totalorder %s25, 0
        %p264 = scmp.eq.s32.totalorder %s26, 0
        %p265 = pnand %p263, %p264
        %p266 = pneg %p265
        // Predicated region
        $region53: #{tpu_custom_call.1} parent=35 // pred_check
          _
        $region54: #{tpu_custom_call.1} parent=35 // pred_check_branch
          %268 = sbr.rel (%p265) target = $region56
        $region55: #{tpu_custom_call.1} parent=35 // pred_region
          %v269 = vld [vmem:[#allocation7] sm:$0x7]
          %v271 = vperm.slane %v269, 0
          %v272 = vperm.slane %v269, 1
          %v273 = vperm.slane %v269, 2
          %v277 = vpack.c.bf16 %v272, %v271
          %v278 = vpack.c.bf16 %v273, %v273
          %v281 = vrot.slane %v277, 3
          %v282 = vrot.slane %v278, 6
          %v283 = vrot.slane %v278, 1
          %vm284 = vcmask 1040384
          %v287 = vsel %vm284, %v277, %v281
          %vm288 = vcmask 1042434
          %v291 = vsel %vm288, %v282, %v283
          %vm292 = vcmask 1041408
          %v293 = vsel %vm292, %v287, %v291
          %vm295 = vcmask 1040384
          %vm296 = vsmask.f32 256
          %vm297 = vmand %vm295, %vm296
          %vm298 = vcmask 1041409
          %vm299 = vsmask.f32 1280
          %vm300 = vmand %vm298, %vm299
          %vm301 = vmor %vm300, %vm297
          %vm302 = vcmask 1042434
          %vm303 = vsmask.f32 2304
          %vm304 = vmand %vm302, %vm303
          %vm305 = vmor %vm304, %vm301
          %v306 = vld [vmem:[#allocation2] sm:$0x7]
          %v307 = vsel %vm305, %v293, %v306
          %308 = vst [vmem:[#allocation2] sm:$0x7] %v307
        $region56: #{tpu_custom_call.1} parent=35 // pred_fallthru
          _
        %v309 = vld [vmem:[#allocation2] sm:$0x7]
        %v310 = vld [vmem:[%s225] sm:$0xf]
        %v311 = vld [vmem:[%s225 + $0x4] sm:$0xf]
        %v312 = vld [vmem:[%s225 + $0x8] sm:$0xf]
        %v313 = vld [vmem:[%s225 + $0xc] sm:$0xf]
        %v314 = vld [vmem:[%s225 + $0x10] sm:$0xf]
        %v315 = vld [vmem:[%s225 + $0x14] sm:$0xf]
        %v316 = vld [vmem:[%s225 + $0x18] sm:$0xf]
        %v317 = vld [vmem:[%s225 + $0x1c] sm:$0xf]
        %v318 = vld [vmem:[%s225 + $0x20] sm:$0xf]
        %v319 = vld [vmem:[%s225 + $0x24] sm:$0xf]
        %v320 = vld [vmem:[%s225 + $0x28] sm:$0xf]
        %v321 = vld [vmem:[%s225 + $0x2c] sm:$0xf]
        %v322 = vld [vmem:[%s225 + $0x30] sm:$0xf]
        %v323 = vld [vmem:[%s225 + $0x34] sm:$0xf]
        %v324 = vld [vmem:[%s225 + $0x38] sm:$0xf]
        %v325 = vld [vmem:[%s225 + $0x3c] sm:$0xf]
        %v326 = vld [vmem:[%s225 + $0x40] sm:$0xf]
        %v327 = vld [vmem:[%s225 + $0x44] sm:$0xf]
        %v328 = vld [vmem:[%s225 + $0x48] sm:$0xf]
        %v329 = vld [vmem:[%s225 + $0x4c] sm:$0xf]
        %v330 = vld [vmem:[%s225 + $0x50] sm:$0xf]
        %v331 = vld [vmem:[%s225 + $0x54] sm:$0xf]
        %v332 = vld [vmem:[%s225 + $0x58] sm:$0xf]
        %v333 = vld [vmem:[%s225 + $0x5c] sm:$0xf]
        %v334 = vld [vmem:[%s225 + $0x60] sm:$0xf]
        %v335 = vld [vmem:[%s225 + $0x64] sm:$0xf]
        %v336 = vld [vmem:[%s225 + $0x68] sm:$0xf]
        %v337 = vld [vmem:[%s225 + $0x6c] sm:$0xf]
        %v338 = vld [vmem:[%s225 + $0x70] sm:$0xf]
        %v339 = vld [vmem:[%s225 + $0x74] sm:$0xf]
        %v340 = vld [vmem:[%s225 + $0x78] sm:$0xf]
        %v341 = vld [vmem:[%s225 + $0x7c] sm:$0xf]
        %v342 = vld [vmem:[%s225 + $0x80] sm:$0xf]
        %v343 = vld [vmem:[%s225 + $0x84] sm:$0xf]
        %v344 = vld [vmem:[%s225 + $0x88] sm:$0xf]
        %v345 = vld [vmem:[%s225 + $0x8c] sm:$0xf]
        %v346 = vld [vmem:[%s225 + $0x90] sm:$0xf]
        %v347 = vld [vmem:[%s225 + $0x94] sm:$0xf]
        %v348 = vld [vmem:[%s225 + $0x98] sm:$0xf]
        %v349 = vld [vmem:[%s225 + $0x9c] sm:$0xf]
        %v350 = vld [vmem:[%s225 + $0xa0] sm:$0xf]
        %v351 = vld [vmem:[%s225 + $0xa4] sm:$0xf]
        %v352 = vld [vmem:[%s225 + $0xa8] sm:$0xf]
        %v353 = vld [vmem:[%s225 + $0xac] sm:$0xf]
        %v354 = vld [vmem:[%s225 + $0xb0] sm:$0xf]
        %v355 = vld [vmem:[%s225 + $0xb4] sm:$0xf]
        %v356 = vld [vmem:[%s225 + $0xb8] sm:$0xf]
        %v357 = vld [vmem:[%s225 + $0xbc] sm:$0xf]
        %359 = vst [vmem:[#allocation1] ss:$9 sm:$0xff] %v309
        %v360 = vld [vmem:[#allocation1] sm:$0xff]
        %v361 = vld [vmem:[#allocation1 + $0x9] sm:$0xff]
        %v362 = vld [vmem:[#allocation1 + $0x12] sm:$0xff]
        %v414 = vunpack.c.l.b16 %v310
        %v415 = vunpack.c.l.b16 %v311
        %v416 = vunpack.c.l.b16 %v312
        %v417 = vunpack.c.l.b16 %v313
        %v418 = vunpack.c.l.b16 %v314
        %v419 = vunpack.c.l.b16 %v315
        %v420 = vunpack.c.l.b16 %v316
        %v421 = vunpack.c.l.b16 %v317
        %v422 = vunpack.c.l.b16 %v318
        %v423 = vunpack.c.l.b16 %v319
        %v424 = vunpack.c.l.b16 %v320
        %v425 = vunpack.c.l.b16 %v321
        %v426 = vunpack.c.l.b16 %v322
        %v427 = vunpack.c.l.b16 %v323
        %v428 = vunpack.c.l.b16 %v324
        %v429 = vunpack.c.l.b16 %v325
        %v430 = vunpack.c.l.b16 %v326
        %v431 = vunpack.c.l.b16 %v327
        %v432 = vunpack.c.l.b16 %v328
        %v433 = vunpack.c.l.b16 %v329
        %v434 = vunpack.c.l.b16 %v330
        %v435 = vunpack.c.l.b16 %v331
        %v436 = vunpack.c.l.b16 %v332
        %v437 = vunpack.c.l.b16 %v333
        %v438 = vunpack.c.l.b16 %v334
        %v439 = vunpack.c.l.b16 %v335
        %v440 = vunpack.c.l.b16 %v336
        %v441 = vunpack.c.l.b16 %v337
        %v442 = vunpack.c.l.b16 %v338
        %v443 = vunpack.c.l.b16 %v339
        %v444 = vunpack.c.l.b16 %v340
        %v445 = vunpack.c.l.b16 %v341
        %v446 = vunpack.c.l.b16 %v342
        %v447 = vunpack.c.l.b16 %v343
        %v448 = vunpack.c.l.b16 %v344
        %v449 = vunpack.c.l.b16 %v345
        %v450 = vunpack.c.l.b16 %v346
        %v451 = vunpack.c.l.b16 %v347
        %v452 = vunpack.c.l.b16 %v348
        %v453 = vunpack.c.l.b16 %v349
        %v454 = vunpack.c.l.b16 %v350
        %v455 = vunpack.c.l.b16 %v351
        %v456 = vunpack.c.l.b16 %v352
        %v457 = vunpack.c.l.b16 %v353
        %v458 = vunpack.c.l.b16 %v354
        %v459 = vunpack.c.l.b16 %v355
        %v460 = vunpack.c.l.b16 %v356
        %v461 = vunpack.c.l.b16 %v357
        %v462 = vpack.c.b16 %v415, %v414
        %v463 = vpack.c.b16 %v417, %v416
        %v464 = vpack.c.b16 %v419, %v418
        %v465 = vpack.c.b16 %v421, %v420
        %v466 = vpack.c.b16 %v423, %v422
        %v467 = vpack.c.b16 %v425, %v424
        %v468 = vpack.c.b16 %v427, %v426
        %v469 = vpack.c.b16 %v429, %v428
        %v470 = vpack.c.b16 %v431, %v430
        %v471 = vpack.c.b16 %v433, %v432
        %v472 = vpack.c.b16 %v435, %v434
        %v473 = vpack.c.b16 %v437, %v436
        %v474 = vpack.c.b16 %v439, %v438
        %v475 = vpack.c.b16 %v441, %v440
        %v476 = vpack.c.b16 %v443, %v442
        %v477 = vpack.c.b16 %v445, %v444
        %v478 = vpack.c.b16 %v447, %v446
        %v479 = vpack.c.b16 %v449, %v448
        %v480 = vpack.c.b16 %v451, %v450
        %v481 = vpack.c.b16 %v453, %v452
        %v482 = vpack.c.b16 %v455, %v454
        %v483 = vpack.c.b16 %v457, %v456
        %v484 = vpack.c.b16 %v459, %v458
        %v485 = vpack.c.b16 %v461, %v460
        %510 = vmatpush.bf16.msra.mxu0 %v469
        %511 = vmatpush.bf16.msra.mxu0 %v468
        %512 = vmatpush.bf16.msra.mxu0 %v467
        %513 = vmatpush.bf16.msra.mxu0 %v466
        %514 = vmatpush.bf16.msra.mxu0 %v465
        %515 = vmatpush.bf16.msra.mxu0 %v464
        %516 = vmatpush.bf16.msra.mxu0 %v463
        %517 = vmatpush.bf16.msra.mxu0 %v462
        %518 = vmatmul.bf16.gmra.mxu0 %v360
        %v519 = vpop.f32.mrf.mxu0
        %v520 = vadd.f32 0.0, %v519
        %v521 = vpop.f32.mrf.mxu0
        %522 = vdwg.mxu0
        %523 = vmatpush.bf16.msra.mxu0 %v477
        %524 = vmatpush.bf16.msra.mxu0 %v476
        %525 = vmatpush.bf16.msra.mxu0 %v475
        %526 = vmatpush.bf16.msra.mxu0 %v474
        %527 = vmatpush.bf16.msra.mxu0 %v473
        %528 = vmatpush.bf16.msra.mxu0 %v472
        %529 = vmatpush.bf16.msra.mxu0 %v471
        %530 = vmatpush.bf16.msra.mxu0 %v470
        %531 = vmatmul.bf16.gmra.mxu0 %v361
        %v532 = vpop.f32.mrf.mxu0
        %v533 = vadd.f32 %v520, %v532
        %v534 = vpop.f32.mrf.mxu0
        %535 = vdwg.mxu0
        %536 = vmatpush.bf16.msra.mxu0 %v485
        %537 = vmatpush.bf16.msra.mxu0 %v484
        %538 = vmatpush.bf16.msra.mxu0 %v483
        %539 = vmatpush.bf16.msra.mxu0 %v482
        %540 = vmatpush.bf16.msra.mxu0 %v481
        %541 = vmatpush.bf16.msra.mxu0 %v480
        %542 = vmatpush.bf16.msra.mxu0 %v479
        %543 = vmatpush.bf16.msra.mxu0 %v478
        %544 = vmatmul.bf16.gmra.mxu0 %v362
        %v545 = vpop.f32.mrf.mxu0
        %v546 = vadd.f32 %v533, %v545
        %v547 = vpop.f32.mrf.mxu0
        %548 = vdwg.mxu0
        %s549 = scalar_lea.vmem [#allocation3], %s26
        %550 = vst [vmem:[%s549] sm:$0x1] %v546
        %p551 = scmp.eq.s32.totalorder %s26, 2
        // Predicated region
        $region57: #{tpu_custom_call.1} parent=35 // pred_check
          %p552 = pneg %p551
        $region58: #{tpu_custom_call.1} parent=35 // pred_check_branch
          %554 = sbr.rel (%p552) target = $region60
        $region59: #{tpu_custom_call.1} parent=35 // pred_region
          %v555 = vld [vmem:[#allocation3] sm:$0x1]
          %v556 = vld [vmem:[#allocation3 + $0x1] sm:$0x1]
          %v557 = vld [vmem:[#allocation3 + $0x2] sm:$0x1]
          %v558 = vld [vmem:[#allocation2] sm:$0x1]
          %vm559 = vcmp.gt.f32.partialorder %v555, 0.0
          %v560 = vsel %vm559, 1, 0
          %v561 = vpack.c.b16 %v560, %v560
          %v562 = vunpack.c.l.b16 %v561
          %v563 = vunpack.c.h.b16 %v561
          %v564 = vunpack.c.l.b16 0
          %v565 = vunpack.c.h.b16 0
          %vm566 = vcmp.ne.s32.totalorder %v562, %v564
          %vm567 = vcmp.ne.s32.totalorder %v563, %v565
          %vm568 = vmpackc.low %vm567, %vm566
          %v569 = vsel %vm568, 1065369472, %v558
          %vm570 = vcmask 1040384
          %vm571 = vsmask.f32 256
          %vm572 = vmand %vm570, %vm571
          %v573 = vsel %vm572, %v569, %v558
          %574 = vst [vmem:[#allocation2] sm:$0x1] %v573
          %v575 = vld [vmem:[#allocation2 + $0x1] sm:$0x1]
          %vm576 = vcmp.gt.f32.partialorder %v556, 0.0
          %v577 = vsel %vm576, 1, 0
          %v578 = vpack.c.b16 %v577, %v577
          %v579 = vunpack.c.l.b16 %v578
          %v580 = vunpack.c.h.b16 %v578
          %v581 = vunpack.c.l.b16 0
          %v582 = vunpack.c.h.b16 0
          %vm583 = vcmp.ne.s32.totalorder %v579, %v581
          %vm584 = vcmp.ne.s32.totalorder %v580, %v582
          %vm585 = vmpackc.low %vm584, %vm583
          %v586 = vsel %vm585, 1065369472, %v575
          %v587 = vsel %vm572, %v586, %v575
          %588 = vst [vmem:[#allocation2 + $0x1] sm:$0x1] %v587
          %v589 = vld [vmem:[#allocation2 + $0x2] sm:$0x1]
          %vm590 = vcmp.gt.f32.partialorder %v557, 0.0
          %v591 = vsel %vm590, 1, 0
          %v592 = vpack.c.b16 %v591, %v591
          %v593 = vunpack.c.l.b16 %v592
          %v594 = vunpack.c.h.b16 %v592
          %v595 = vunpack.c.l.b16 0
          %v596 = vunpack.c.h.b16 0
          %vm597 = vcmp.ne.s32.totalorder %v593, %v595
          %vm598 = vcmp.ne.s32.totalorder %v594, %v596
          %vm599 = vmpackc.low %vm598, %vm597
          %v600 = vsel %vm599, 1065369472, %v589
          %v601 = vsel %vm572, %v600, %v589
          %602 = vst [vmem:[#allocation2 + $0x2] sm:$0x1] %v601
        $region60: #{tpu_custom_call.1} parent=35 // pred_fallthru
          _
        %p603 = scmp.eq.s32.totalorder %s25, 1
        %p604 = pnand %p603, %p551
        %p605 = pneg %p604
        // Predicated region
        $region61: #{tpu_custom_call.1} parent=35 // pred_check
          _
        $region62: #{tpu_custom_call.1} parent=35 // pred_check_branch
          %607 = sbr.rel (%p604) target = $region64
        $region63: #{tpu_custom_call.1} parent=35 // pred_region
          %v608 = vld [vmem:[#allocation2] sm:$0x7]
          %v609 = vunpack.c.l.bf16 %v608
          %v610 = vld [vmem:[#allocation7] sm:$0x7]
          %v611 = vld [vmem:[#allocation9] sm:$0x7]
          %v612 = vld [vmem:[#allocation10] sm:$0x7]
          %v614 = vrot.slane %v609, 1
          %v615 = vrot.slane %v609, 2
          %v616 = vrot.slane %v609, 3
          %vm617 = vcmask 1040384
          %v618 = vsel %vm617, %v609, %v614
          %vm619 = vcmask 1042434
          %v620 = vsel %vm619, %v615, %v616
          %vm621 = vcmask 1041408
          %v622 = vsel %vm621, %v618, %v620
          %v624 = vmul.f32 %v611, %v622
          %v625 = vsub.f32 1.0, %v609
          %v627 = vrot.slane %v625, 1
          %v628 = vrot.slane %v625, 2
          %v629 = vrot.slane %v625, 3
          %v630 = vsel %vm617, %v625, %v627
          %v631 = vsel %vm619, %v628, %v629
          %v632 = vsel %vm621, %v630, %v631
          %v634 = vmul.f32 %v611, %v632
          %v636 = vperm.slane %v624, 0
          %v637 = vperm.slane %v624, 1
          %v638 = vperm.slane %v624, 2
          %v642 = vsel %vm617, %v636, 0.0
          %v643 = vsel %vm617, %v637, 0.0
          %v644 = vadd.f32 %v642, %v643
          %v645 = vsel %vm617, %v638, 0.0
          %v646 = vadd.f32 %v644, %v645
          %647 = vadd.xlane.f32.xlu0 %v646
          %v648 = vpop.xlane.xlu0 %647
          %v649 = vrot.slane %v648, 4
          %v650 = vadd.f32 %v648, %v649
          %v651 = vrot.slane %v650, 2
          %v652 = vadd.f32 %v650, %v651
          %v653 = vrot.slane %v652, 1
          %v654 = vadd.f32 %v652, %v653
          %s655 = vtos %v654
          %v657 = vperm.slane %v634, 0
          %v658 = vperm.slane %v634, 1
          %v659 = vperm.slane %v634, 2
          %v663 = vsel %vm617, %v657, 0.0
          %v664 = vsel %vm617, %v658, 0.0
          %v665 = vadd.f32 %v663, %v664
          %v666 = vsel %vm617, %v659, 0.0
          %v667 = vadd.f32 %v665, %v666
          %668 = vadd.xlane.f32.xlu0 %v667
          %v669 = vpop.xlane.xlu0 %668
          %v670 = vrot.slane %v669, 4
          %v671 = vadd.f32 %v669, %v670
          %v672 = vrot.slane %v671, 2
          %v673 = vadd.f32 %v671, %v672
          %v674 = vrot.slane %v673, 1
          %v675 = vadd.f32 %v673, %v674
          %s676 = vtos %v675
          %v677 = vsub.f32 %v612, 1.0
          %v678 = vand.u32 2147483647, %v677
          %v679 = vmul.f32 %v678, %v610
          %v681 = vperm.slane %v679, 0
          %v682 = vperm.slane %v679, 1
          %v683 = vperm.slane %v679, 2
          %v687 = vsel %vm617, %v681, 0.0
          %v688 = vsel %vm617, %v682, 0.0
          %v689 = vadd.f32 %v687, %v688
          %v690 = vsel %vm617, %v683, 0.0
          %v691 = vadd.f32 %v689, %v690
          %692 = vadd.xlane.f32.xlu0 %v691
          %v693 = vpop.xlane.xlu0 %692
          %v694 = vrot.slane %v693, 4
          %v695 = vadd.f32 %v693, %v694
          %v696 = vrot.slane %v695, 2
          %v697 = vadd.f32 %v695, %v696
          %v698 = vrot.slane %v697, 1
          %v699 = vadd.f32 %v697, %v698
          %s700 = vtos %v699
          %v701 = vsub.f32 %v612, 0.6
          %v702 = vand.u32 2147483647, %v701
          %v703 = vmul.f32 %v702, %v624
          %v705 = vperm.slane %v703, 0
          %v706 = vperm.slane %v703, 1
          %v707 = vperm.slane %v703, 2
          %v711 = vsel %vm617, %v705, 0.0
          %v712 = vsel %vm617, %v706, 0.0
          %v713 = vadd.f32 %v711, %v712
          %v714 = vsel %vm617, %v707, 0.0
          %v715 = vadd.f32 %v713, %v714
          %716 = vadd.xlane.f32.xlu0 %v715
          %v717 = vpop.xlane.xlu0 %716
          %v718 = vrot.slane %v717, 4
          %v719 = vadd.f32 %v717, %v718
          %v720 = vrot.slane %v719, 2
          %v721 = vadd.f32 %v719, %v720
          %v722 = vrot.slane %v721, 1
          %v723 = vadd.f32 %v721, %v722
          %s724 = vtos %v723
          %s725 = smax.f32 %s655, 1.0
          %v726 = vstv %s725
          %v727 = vrcp.pop %v726
          %v728 = vmul.f32 %v726, %v727
          %v729 = vsub.f32 1.0, %v728
          %v730 = vmul.f32 %v727, %v729
          %v731 = vadd.f32 %v727, %v730
          %vm732 = vweird.f32 %v726
          %vm733 = vweird.f32 %v727
          %vm734 = vmor %vm732, %vm733
          %v735 = vsel %vm734, %v727, %v731
          %v736 = vand.u32 2147483647, %v726
          %vm737 = vcmp.eq.f32.partialorder %v736, 8.507059e+37
          %v738 = vand.u32 %v726, 2147483648
          %v739 = vor.u32 1.1754944e-38, %v738
          %v740 = vsel %vm737, %v739, %v735
          %s741 = vtos %v740
          %s742 = smul.f32 %s724, %s741
          %v743 = vsub.f32 %v612, 0.4
          %v744 = vand.u32 2147483647, %v743
          %v745 = vmul.f32 %v744, %v634
          %v747 = vperm.slane %v745, 0
          %v748 = vperm.slane %v745, 1
          %v749 = vperm.slane %v745, 2
          %v753 = vsel %vm617, %v747, 0.0
          %v754 = vsel %vm617, %v748, 0.0
          %v755 = vadd.f32 %v753, %v754
          %v756 = vsel %vm617, %v749, 0.0
          %v757 = vadd.f32 %v755, %v756
          %758 = vadd.xlane.f32.xlu0 %v757
          %v759 = vpop.xlane.xlu0 %758
          %v760 = vrot.slane %v759, 4
          %v761 = vadd.f32 %v759, %v760
          %v762 = vrot.slane %v761, 2
          %v763 = vadd.f32 %v761, %v762
          %v764 = vrot.slane %v763, 1
          %v765 = vadd.f32 %v763, %v764
          %s766 = vtos %v765
          %s767 = smax.f32 %s676, 1.0
          %v768 = vstv %s767
          %v769 = vrcp.pop %v768
          %v770 = vmul.f32 %v768, %v769
          %v771 = vsub.f32 1.0, %v770
          %v772 = vmul.f32 %v769, %v771
          %v773 = vadd.f32 %v769, %v772
          %vm774 = vweird.f32 %v768
          %vm775 = vweird.f32 %v769
          %vm776 = vmor %vm774, %vm775
          %v777 = vsel %vm776, %v769, %v773
          %v778 = vand.u32 2147483647, %v768
          %vm779 = vcmp.eq.f32.partialorder %v778, 8.507059e+37
          %v780 = vand.u32 %v768, 2147483648
          %v781 = vor.u32 1.1754944e-38, %v780
          %v782 = vsel %vm779, %v781, %v777
          %s783 = vtos %v782
          %s784 = smul.f32 %s766, %s783
          %s785 = smul.f32 %s700, 0.0625
          %s786 = sadd.f32 %s785, %s742
          %s787 = sadd.f32 %s786, %s784
          %s788 = scalar_lea.smem [#allocation12], 0
          %789 = sst [smem:[%s788]] %s787
        $region64: #{tpu_custom_call.1} parent=35 // pred_fallthru
          _
        // Predicated region
        $region65: #{tpu_custom_call.1} parent=35 // pred_check
          %p790 = pneg %p135
        $region66: #{tpu_custom_call.1} parent=35 // pred_check_branch
          %792 = sbr.rel (%p790) target = $region68
        $region67: #{tpu_custom_call.1} parent=35 // pred_region
          %794 = vsyncadd [#allocation6], 0
          %s796 = sshll.u32 %s4, 4
          %s797 = int_to_ptr.hbm [resolvable:$true] %s796
          %799 = dma.smem_to_hbm [#allocation12], 16, %s797, [#allocation6]
        $region68: #{tpu_custom_call.1} parent=35 // pred_fallthru
          _
        // Predicated region
        $region69: #{tpu_custom_call.1} parent=35 // pred_check
          %p800 = pneg %p135
        $region70: #{tpu_custom_call.1} parent=35 // pred_check_branch
          %802 = sbr.rel (%p800) target = $region72
        $region71: #{tpu_custom_call.1} parent=35 // pred_region
          %804 = dma.done [#allocation6], 16
        $region72: #{tpu_custom_call.1} parent=35 // pred_fallthru
          _
        %805 = sfence
      $region36: #{tpu_custom_call.1} parent=5 // pred_fallthru
        _
      %p806 = scmp.le.s32.totalorder 2, %s16
      // Predicated region
      $region73: #{tpu_custom_call.1} parent=5 // pred_check
        %p807 = pneg %p806
      $region74: #{tpu_custom_call.1} parent=5 // pred_check_branch
        %809 = sbr.rel (%p807) target = $region76
      $region75: #{tpu_custom_call.1} parent=5 // pred_region
        %s810 = ssub.s32 %s16, 2
      $region76: #{tpu_custom_call.1} parent=5 // pred_fallthru
        _
    $region6: #{tpu_custom_call.1} parent=1 // loop_footer
      %s20 = sadd.s32 1, %s16
    $region7: #{tpu_custom_call.1} parent=1 // loop_footer_branch
      %15 = sbr.rel target = $region3
    $region8: #{tpu_custom_call.1} parent=1 // loop_exit
      _
    %811 = vsyncpa [#allocation5], 1
    %s812 = scalar_lea.sflag [#allocation5], 1
    %813 = vsyncpa %s812, 1
    %814 = vsyncpa [#allocation8], 1
    %815 = vsyncpa [#allocation11], 1
    %816 = vsyncpa [#allocation6], 1
    %s817 = scalar_lea.sflag [#allocation6], 1
    %818 = vsyncpa %s817, 1

</llo_original>
